<compile_context>
chip_gen: v6e
topology: v6e:2x2x1
jax: 0.10.0
libtpu: 0.0.40
codegen_flags: <defaults>
</compile_context>

<pallas_src>
import functools
import math

import jax
import jax.numpy as jnp
from jax.experimental import pallas as pl
from jax.experimental.pallas import tpu as pltpu


def _round_up(x, m):
    return ((x + m - 1) // m) * m


def critic_kernel(s_ref, a_ref, w1s_ref, w1a_ref, b1_ref,
                  w2_ref, b2_ref, w3_ref, b3_ref, o_ref):
    # Layer 1: split matmul (replaces concat([state, action]) @ w1) + bias + ReLU.
    h1 = jnp.dot(s_ref[...], w1s_ref[...], preferred_element_type=jnp.float32)
    h1 = h1 + jnp.dot(a_ref[...], w1a_ref[...], preferred_element_type=jnp.float32)
    h1 = jnp.maximum(h1 + b1_ref[...], 0.0)

    # Layer 2: Linear(hidden -> hidden) + ReLU.
    h2 = jnp.dot(h1, w2_ref[...], preferred_element_type=jnp.float32)
    h2 = jnp.maximum(h2 + b2_ref[...], 0.0)

    # Layer 3: Linear(hidden -> 1).  N=1 on the MXU wastes nearly all output
    # columns, so do it on the VPU (multiply) + XLU (cross-lane reduce); those
    # units overlap with the MXU work of the next pipelined tile.
    out = jnp.sum(h2 * w3_ref[...], axis=-1, keepdims=True) + b3_ref[...]
    o_ref[...] = out.astype(o_ref.dtype)


@functools.partial(jax.jit, static_argnames=("tile_b",))
def critic_forward(state, action, params, *, tile_b=2048):
    """Pallas forward of the Critic.  Batch is tiled; weights stay VMEM-resident."""
    w1_s, w1_a, b1, w2, b2, w3_row, b3 = params
    state = state.astype(jnp.float32)
    action = action.astype(jnp.float32)

    B, state_dim = state.shape
    action_dim = action.shape[1]

    # Tile the batch: up to `tile_b` rows per tile, padded to the 8-row (f32
    # sublane) grain so every load/store stays on the full-width path.
    tile = min(tile_b, _round_up(B, 8))
    b_pad = _round_up(B, tile)
    if b_pad != B:
        state = jnp.pad(state, ((0, b_pad - B), (0, 0)))
        action = jnp.pad(action, ((0, b_pad - B), (0, 0)))
    grid = (b_pad // tile,)

    def tiled(ncols):
        return pl.BlockSpec((tile, ncols), lambda i: (i, 0))

    def resident(arr):  # constant block index -> stays in VMEM across grid steps
        return pl.BlockSpec(arr.shape, lambda i: (0, 0))

    out = pl.pallas_call(
        critic_kernel,
        out_shape=jax.ShapeDtypeStruct((b_pad, 1), jnp.float32),
        grid_spec=pltpu.PrefetchScalarGridSpec(
            num_scalar_prefetch=0,
            grid=grid,
            in_specs=[
                tiled(state_dim),        # state  (TILE_B, state_dim)
                tiled(action_dim),       # action (TILE_B, action_dim)
                resident(w1_s),          # (state_dim, hidden)
                resident(w1_a),          # (action_dim, hidden)
                resident(b1),            # (1, hidden)
                resident(w2),            # (hidden, hidden)
                resident(b2),            # (1, hidden)
                resident(w3_row),        # (1, hidden)
                resident(b3),            # (1, 1)
            ],
            out_specs=pl.BlockSpec((tile, 1), lambda i: (i, 0)),
        ),
        compiler_params=pltpu.CompilerParams(
            dimension_semantics=("parallel",)),  # megacore split on v7x
    )(state, action, w1_s, w1_a, b1, w2, b2, w3_row, b3)

    return out[:B]


def init_critic_params(key, state_dim, action_dim, hidden_dim=128):
    """Init matching the PyTorch module's reset_parameters:
    weights ~ U(-1/sqrt(weight.size(0)), +...) where weight.size(0) is
    out_features for nn.Linear; biases keep the default nn.Linear init
    U(-1/sqrt(in_features), +...).  Stored kernel-friendly: w1 pre-split along
    the input dim, w3 as a (1, hidden) row, all (in, out) layout."""
    in_dim = state_dim + action_dim
    dims = [(in_dim, hidden_dim), (hidden_dim, hidden_dim), (hidden_dim, 1)]
    keys = jax.random.split(key, 2 * len(dims))
    raw = []
    for i, (fan_in, fan_out) in enumerate(dims):
        w_lim = 1.0 / math.sqrt(fan_out)   # weight.size(0) == out_features
        b_lim = 1.0 / math.sqrt(fan_in)    # default nn.Linear bias init
        w = jax.random.uniform(keys[2 * i], (fan_in, fan_out), jnp.float32,
                               minval=-w_lim, maxval=w_lim)
        b = jax.random.uniform(keys[2 * i + 1], (1, fan_out), jnp.float32,
                               minval=-b_lim, maxval=b_lim)
        raw.extend([w, b])
    w1, b1, w2, b2, w3, b3 = raw
    w1_s, w1_a = w1[:state_dim], w1[state_dim:]
    w3_row = w3.T                                  # (1, hidden_dim)
    return (w1_s, w1_a, b1, w2, b2, w3_row, b3)


def critic_reference(state, action, params):
    """Pure-JAX reference (mirrors the PyTorch forward exactly)."""
    w1_s, w1_a, b1, w2, b2, w3_row, b3 = params
    w1 = jnp.concatenate([w1_s, w1_a], axis=0)
    x = jnp.concatenate([state, action], axis=1)
    h1 = jnp.maximum(x @ w1 + b1, 0.0)
    h2 = jnp.maximum(h1 @ w2 + b2, 0.0)
    return h2 @ w3_row.T + b3


if __name__ == "__main__":
    key = jax.random.PRNGKey(0)
    k_state, k_action, k_params = jax.random.split(key, 3)

    B, state_dim, action_dim, hidden_dim = 8, 16, 8, 128
    state = jax.random.normal(k_state, (B, state_dim), jnp.float32)
    action = jax.random.normal(k_action, (B, action_dim), jnp.float32)
    params = init_critic_params(k_params, state_dim, action_dim, hidden_dim)

    out = jax.block_until_ready(critic_forward(state, action, params))
    ref = critic_reference(state, action, params)
    assert out.shape == (B, 1), out.shape
    assert jnp.allclose(out, ref, atol=1e-5, rtol=1e-5)

    # Also exercise the multi-tile (padded, pipelined) batch-grid path with a
    # small forced tile size so the grid has several steps.
    B2 = 300
    state2 = jax.random.normal(jax.random.PRNGKey(1), (B2, state_dim), jnp.float32)
    action2 = jax.random.normal(jax.random.PRNGKey(2), (B2, action_dim), jnp.float32)
    out2 = jax.block_until_ready(
        critic_forward(state2, action2, params, tile_b=128))
    ref2 = critic_reference(state2, action2, params)
    assert out2.shape == (B2, 1), out2.shape
    assert jnp.allclose(out2, ref2, atol=1e-5, rtol=1e-5)

    print("KERNEL_OK")
</pallas_src>

<mosaic_0001>
module attributes {stable_mosaic.version = 11 : i64} {
  func.func @critic_kernel(%arg0: i32, %arg1: memref<8x16xf32, #tpu.memory_space<vmem>>, %arg2: memref<8x8xf32, #tpu.memory_space<vmem>>, %arg3: memref<16x128xf32, #tpu.memory_space<vmem>>, %arg4: memref<8x128xf32, #tpu.memory_space<vmem>>, %arg5: memref<1x128xf32, #tpu.memory_space<vmem>>, %arg6: memref<128x128xf32, #tpu.memory_space<vmem>>, %arg7: memref<1x128xf32, #tpu.memory_space<vmem>>, %arg8: memref<1x128xf32, #tpu.memory_space<vmem>>, %arg9: memref<1x1xf32, #tpu.memory_space<vmem>>, %arg10: memref<8x1xf32, #tpu.memory_space<vmem>>) attributes {dimension_semantics = [#tpu.dimension_semantics<parallel>], iteration_bounds = array<i64: 1>, scalar_prefetch = 0 : i64, scratch_operands = 0 : i64, tpu.core_type = #tpu.core_type<tc>, window_params = [{transform_indices = @transform_0, window_bounds = array<i64: 8, 16>}, {transform_indices = @transform_1, window_bounds = array<i64: 8, 8>}, {pipeline_mode = #tpu.pipeline_mode<synchronous>, transform_indices = @transform_2, window_bounds = array<i64: 16, 128>}, {pipeline_mode = #tpu.pipeline_mode<synchronous>, transform_indices = @transform_3, window_bounds = array<i64: 8, 128>}, {pipeline_mode = #tpu.pipeline_mode<synchronous>, transform_indices = @transform_4, window_bounds = array<i64: 1, 128>}, {pipeline_mode = #tpu.pipeline_mode<synchronous>, transform_indices = @transform_5, window_bounds = array<i64: 128, 128>}, {pipeline_mode = #tpu.pipeline_mode<synchronous>, transform_indices = @transform_6, window_bounds = array<i64: 1, 128>}, {pipeline_mode = #tpu.pipeline_mode<synchronous>, transform_indices = @transform_7, window_bounds = array<i64: 1, 128>}, {pipeline_mode = #tpu.pipeline_mode<synchronous>, transform_indices = @transform_8, window_bounds = array<i64: 1, 1>}, {transform_indices = @transform_9, window_bounds = array<i64: 8, 1>}]} {
    %c0 = arith.constant 0 : index
    %c0_0 = arith.constant 0 : index
    %0 = vector.load %arg1[%c0, %c0_0] : memref<8x16xf32, #tpu.memory_space<vmem>>, vector<8x16xf32>
    %c0_1 = arith.constant 0 : index
    %c0_2 = arith.constant 0 : index
    %1 = vector.load %arg3[%c0_1, %c0_2] : memref<16x128xf32, #tpu.memory_space<vmem>>, vector<16x128xf32>
    %cst = arith.constant dense<0.000000e+00> : vector<8x128xf32>
    %2 = tpu.matmul %0, %1, %cst {dimension_numbers = #tpu.dot_dimension_numbers<[1], [0], [0], [1], [0, 0, 1, 1], [], []>} : vector<8x16xf32>, vector<16x128xf32>, vector<8x128xf32> -> vector<8x128xf32>
    %c0_3 = arith.constant 0 : index
    %c0_4 = arith.constant 0 : index
    %3 = vector.load %arg2[%c0_3, %c0_4] : memref<8x8xf32, #tpu.memory_space<vmem>>, vector<8x8xf32>
    %c0_5 = arith.constant 0 : index
    %c0_6 = arith.constant 0 : index
    %4 = vector.load %arg4[%c0_5, %c0_6] : memref<8x128xf32, #tpu.memory_space<vmem>>, vector<8x128xf32>
    %cst_7 = arith.constant dense<0.000000e+00> : vector<8x128xf32>
    %5 = tpu.matmul %3, %4, %cst_7 {dimension_numbers = #tpu.dot_dimension_numbers<[1], [0], [0], [1], [0, 0, 1, 1], [], []>} : vector<8x8xf32>, vector<8x128xf32>, vector<8x128xf32> -> vector<8x128xf32>
    %6 = arith.addf %2, %5 : vector<8x128xf32>
    %c0_8 = arith.constant 0 : index
    %c0_9 = arith.constant 0 : index
    %7 = vector.load %arg5[%c0_8, %c0_9] : memref<1x128xf32, #tpu.memory_space<vmem>>, vector<1x128xf32>
    %8 = vector.broadcast %7 : vector<1x128xf32> to vector<8x128xf32>
    %9 = arith.addf %6, %8 : vector<8x128xf32>
    %cst_10 = arith.constant 0.000000e+00 : f32
    %10 = vector.broadcast %cst_10 : f32 to vector<8x128xf32>
    %11 = arith.maximumf %9, %10 : vector<8x128xf32>
    %c0_11 = arith.constant 0 : index
    %c0_12 = arith.constant 0 : index
    %12 = vector.load %arg6[%c0_11, %c0_12] : memref<128x128xf32, #tpu.memory_space<vmem>>, vector<128x128xf32>
    %cst_13 = arith.constant dense<0.000000e+00> : vector<8x128xf32>
    %13 = tpu.matmul %11, %12, %cst_13 {dimension_numbers = #tpu.dot_dimension_numbers<[1], [0], [0], [1], [0, 0, 1, 1], [], []>} : vector<8x128xf32>, vector<128x128xf32>, vector<8x128xf32> -> vector<8x128xf32>
    %c0_14 = arith.constant 0 : index
    %c0_15 = arith.constant 0 : index
    %14 = vector.load %arg7[%c0_14, %c0_15] : memref<1x128xf32, #tpu.memory_space<vmem>>, vector<1x128xf32>
    %15 = vector.broadcast %14 : vector<1x128xf32> to vector<8x128xf32>
    %16 = arith.addf %13, %15 : vector<8x128xf32>
    %cst_16 = arith.constant 0.000000e+00 : f32
    %17 = vector.broadcast %cst_16 : f32 to vector<8x128xf32>
    %18 = arith.maximumf %16, %17 : vector<8x128xf32>
    %c0_17 = arith.constant 0 : index
    %c0_18 = arith.constant 0 : index
    %19 = vector.load %arg8[%c0_17, %c0_18] : memref<1x128xf32, #tpu.memory_space<vmem>>, vector<1x128xf32>
    %20 = vector.broadcast %19 : vector<1x128xf32> to vector<8x128xf32>
    %21 = arith.mulf %18, %20 : vector<8x128xf32>
    %cst_19 = arith.constant dense<0.000000e+00> : vector<8xf32>
    %22 = vector.multi_reduction <add>, %21, %cst_19 [1] : vector<8x128xf32> to vector<8xf32>
    %23 = vector.shape_cast %22 : vector<8xf32> to vector<8x1xf32>
    %c0_20 = arith.constant 0 : index
    %c0_21 = arith.constant 0 : index
    %24 = vector.load %arg9[%c0_20, %c0_21] : memref<1x1xf32, #tpu.memory_space<vmem>>, vector<1x1xf32>
    %25 = vector.broadcast %24 : vector<1x1xf32> to vector<8x1xf32>
    %26 = arith.addf %23, %25 : vector<8x1xf32>
    %c0_22 = arith.constant 0 : index
    %c0_23 = arith.constant 0 : index
    %27 = vector.load %arg10[%c0_22, %c0_23] : memref<8x1xf32, #tpu.memory_space<vmem>>, vector<8x1xf32>
    tpu.vector_store %arg10[%c0_22, %c0_23], %26 {strides = array<i32>} : memref<8x1xf32, #tpu.memory_space<vmem>>, vector<8x1xf32>,
    return
  }
  func.func @transform_0(%arg0: i32) -> (i32, i32) {
    %c0_i32 = arith.constant 0 : i32
    %c0_i32_0 = arith.constant 0 : i32
    return %arg0, %c0_i32 : i32, i32
  }
  func.func @transform_1(%arg0: i32) -> (i32, i32) {
    %c0_i32 = arith.constant 0 : i32
    %c0_i32_0 = arith.constant 0 : i32
    return %arg0, %c0_i32 : i32, i32
  }
  func.func @transform_2(%arg0: i32) -> (i32, i32) {
    %c0_i32 = arith.constant 0 : i32
    %c0_i32_0 = arith.constant 0 : i32
    %c0_i32_1 = arith.constant 0 : i32
    return %c0_i32, %c0_i32_0 : i32, i32
  }
  func.func @transform_3(%arg0: i32) -> (i32, i32) {
    %c0_i32 = arith.constant 0 : i32
    %c0_i32_0 = arith.constant 0 : i32
    %c0_i32_1 = arith.constant 0 : i32
    return %c0_i32, %c0_i32_0 : i32, i32
  }
  func.func @transform_4(%arg0: i32) -> (i32, i32) {
    %c0_i32 = arith.constant 0 : i32
    %c0_i32_0 = arith.constant 0 : i32
    %c0_i32_1 = arith.constant 0 : i32
    return %c0_i32, %c0_i32_0 : i32, i32
  }
  func.func @transform_5(%arg0: i32) -> (i32, i32) {
    %c0_i32 = arith.constant 0 : i32
    %c0_i32_0 = arith.constant 0 : i32
    %c0_i32_1 = arith.constant 0 : i32
    return %c0_i32, %c0_i32_0 : i32, i32
  }
  func.func @transform_6(%arg0: i32) -> (i32, i32) {
    %c0_i32 = arith.constant 0 : i32
    %c0_i32_0 = arith.constant 0 : i32
    %c0_i32_1 = arith.constant 0 : i32
    return %c0_i32, %c0_i32_0 : i32, i32
  }
  func.func @transform_7(%arg0: i32) -> (i32, i32) {
    %c0_i32 = arith.constant 0 : i32
    %c0_i32_0 = arith.constant 0 : i32
    %c0_i32_1 = arith.constant 0 : i32
    return %c0_i32, %c0_i32_0 : i32, i32
  }
  func.func @transform_8(%arg0: i32) -> (i32, i32) {
    %c0_i32 = arith.constant 0 : i32
    %c0_i32_0 = arith.constant 0 : i32
    %c0_i32_1 = arith.constant 0 : i32
    return %c0_i32, %c0_i32_0 : i32, i32
  }
  func.func @transform_9(%arg0: i32) -> (i32, i32) {
    %c0_i32 = arith.constant 0 : i32
    %c0_i32_0 = arith.constant 0 : i32
    return %arg0, %c0_i32 : i32, i32
  }
}

</mosaic_0001>

<llo_original>
// kernel: critic_forward.1
$region0: #{critic_forward.1}
  #allocation0 [shape = 'u32[]', space=smem, size = 0x4, offset = 0x4, fixed_abs, tag = 'smem constant byte address 0x4 - core index']
  #allocation1 [shape = 'u32[144,128]{1,0:T(1,128)}', space=vmem, size = 0x12000, scoped, tag = 'internal scratch']
  #allocation2 [shape = 'f32[1,1]{1,0:T(1,128)S(1)}', space=vmem, size = 0x200, scoped, tag = 'scoped memory for critic_forward.1']
  %s0 = inlined_call_operand.hbm [shape: f32[8,16], index: 0, kind: input, shape index: {}]
  %s1 = inlined_call_operand.hbm [shape: f32[8,8], index: 1, kind: input, shape index: {}]
  %s2 = inlined_call_operand.hbm [shape: f32[16,128], index: 2, kind: input, shape index: {}]
  %s3 = inlined_call_operand.hbm [shape: f32[8,128], index: 3, kind: input, shape index: {}]
  %s4 = inlined_call_operand.vmem [shape: f32[1,128], index: 4, kind: input, shape index: {}]
  %s5 = inlined_call_operand.hbm [shape: f32[128,128], index: 5, kind: input, shape index: {}]
  %s6 = inlined_call_operand.vmem [shape: f32[1,128], index: 6, kind: input, shape index: {}]
  %s7 = inlined_call_operand.vmem [shape: f32[1,128], index: 7, kind: input, shape index: {}]
  %s8 = inlined_call_operand.<no memory space> [shape: f32[1,1], index: 8, kind: input, shape index: {}]
  %s9 = inlined_call_operand.vmem [shape: f32[8,1], index: 9, kind: output, shape index: {}]
  %s10 = sld [smem:[#allocation0]]
  $region66: #{critic_forward.1} parent=0
    _
  %s12 = ssub.s32 1, %s10
  %s13 = scalar_select 0, %s12, %s10
  %v14 = vstv %s8
  %15 = vst [vmem:[#allocation2] sm:$0x1] %v14
  $region1: #{critic_forward.1} parent=0
    #allocation3 [shape = 'u8[4096]{0}', space=vmem, size = 0x1000, scoped, tag = 'input window, operand 0, single buffered']
    #allocation4 [shape = 's32[1]{0}', space=sflag, size = 0x4, scoped, tag = 'scoped memory for critic_forward.1']
    #allocation5 [shape = 'u8[4096]{0}', space=vmem, size = 0x1000, scoped, tag = 'input window, operand 1, single buffered']
    #allocation6 [shape = 's32[1]{0}', space=sflag, size = 0x4, scoped, tag = 'scoped memory for critic_forward.1']
    #allocation7 [shape = 'u8[8192]{0}', space=vmem, size = 0x2000, scoped, tag = 'input window, operand 2, single buffered']
    #allocation8 [shape = 'u8[4096]{0}', space=vmem, size = 0x1000, scoped, tag = 'input window, operand 3, single buffered']
    #allocation9 [shape = 's32[1]{0}', space=sflag, size = 0x4, scoped, tag = 'scoped memory for critic_forward.1']
    #allocation10 [shape = 'u8[65536]{0}', space=vmem, size = 0x10000, scoped, tag = 'input window, operand 5, single buffered']
    %16 = vsyncpa [#allocation4], 0
    %17 = vsyncpa [#allocation6], 0
    %18 = vsyncpa [#allocation9], 0
    // Predicated region
    $region2: #{critic_forward.1} parent=1 // pred_check
      _
    $region3: #{critic_forward.1} parent=1 // pred_check_branch
      %20 = sbr.rel (0) target = $region5
    $region4: #{critic_forward.1} parent=1 // pred_region
      %s22 = ssub.s32 128, 128
      %23 = vsyncadd [#allocation4], %s22
      %s25 = sshll.u32 [#allocation3], 4
      %s26 = int_to_ptr.vmem [resolvable:$true] %s25
      %28 = dma.hbm_to_vmem [thread:$0]  %s0, 128, %s26, [#allocation4]
    $region5: #{critic_forward.1} parent=1 // pred_fallthru
      _
    // Predicated region
    $region6: #{critic_forward.1} parent=1 // pred_check
      _
    $region7: #{critic_forward.1} parent=1 // pred_check_branch
      %30 = sbr.rel (0) target = $region9
    $region8: #{critic_forward.1} parent=1 // pred_region
      %s32 = ssub.s32 128, 128
      %33 = vsyncadd [#allocation6], %s32
      %s35 = sshll.u32 [#allocation5], 4
      %s36 = int_to_ptr.vmem [resolvable:$true] %s35
      %38 = dma.hbm_to_vmem [thread:$0]  %s1, 128, %s36, [#allocation6]
    $region9: #{critic_forward.1} parent=1 // pred_fallthru
      _
    // Predicated region
    $region10: #{critic_forward.1} parent=1 // pred_check
      _
    $region11: #{critic_forward.1} parent=1 // pred_check_branch
      %40 = sbr.rel (0) target = $region13
    $region12: #{critic_forward.1} parent=1 // pred_region
      %s42 = ssub.s32 256, 256
      %43 = vsyncadd [#allocation6], %s42
      %s44 = sshll.u32 [#allocation7], 4
      %s45 = int_to_ptr.vmem [resolvable:$true] %s44
      %50 = dma.hbm_to_vmem [thread:$0]  %s2, 256, %s45, [#allocation6], 128, 128, 8
    $region13: #{critic_forward.1} parent=1 // pred_fallthru
      _
    // Predicated region
    $region14: #{critic_forward.1} parent=1 // pred_check
      _
    $region15: #{critic_forward.1} parent=1 // pred_check_branch
      %52 = sbr.rel (0) target = $region17
    $region16: #{critic_forward.1} parent=1 // pred_region
      %s54 = ssub.s32 128, 128
      %55 = vsyncadd [#allocation9], %s54
      %s57 = sshll.u32 [#allocation8], 4
      %s58 = int_to_ptr.vmem [resolvable:$true] %s57
      %60 = dma.hbm_to_vmem [thread:$0]  %s3, 128, %s58, [#allocation9]
    $region17: #{critic_forward.1} parent=1 // pred_fallthru
      _
    // Predicated region
    $region18: #{critic_forward.1} parent=1 // pred_check
      _
    $region19: #{critic_forward.1} parent=1 // pred_check_branch
      %62 = sbr.rel (0) target = $region21
    $region20: #{critic_forward.1} parent=1 // pred_region
      _
    $region21: #{critic_forward.1} parent=1 // pred_fallthru
      _
    // Predicated region
    $region22: #{critic_forward.1} parent=1 // pred_check
      _
    $region23: #{critic_forward.1} parent=1 // pred_check_branch
      %64 = sbr.rel (0) target = $region25
    $region24: #{critic_forward.1} parent=1 // pred_region
      %s66 = ssub.s32 2048, 2048
      %67 = vsyncadd [#allocation9], %s66
      %s68 = sshll.u32 [#allocation10], 4
      %s69 = int_to_ptr.vmem [resolvable:$true] %s68
      %74 = dma.hbm_to_vmem [thread:$0]  %s5, 2048, %s69, [#allocation9], 128, 128, 8
    $region25: #{critic_forward.1} parent=1 // pred_fallthru
      _
    // Predicated region
    $region26: #{critic_forward.1} parent=1 // pred_check
      _
    $region27: #{critic_forward.1} parent=1 // pred_check_branch
      %76 = sbr.rel (0) target = $region29
    $region28: #{critic_forward.1} parent=1 // pred_region
      _
    $region29: #{critic_forward.1} parent=1 // pred_fallthru
      _
    // Predicated region
    $region30: #{critic_forward.1} parent=1 // pred_check
      _
    $region31: #{critic_forward.1} parent=1 // pred_check_branch
      %78 = sbr.rel (0) target = $region33
    $region32: #{critic_forward.1} parent=1 // pred_region
      _
    $region33: #{critic_forward.1} parent=1 // pred_fallthru
      _
    // Predicated region
    $region34: #{critic_forward.1} parent=1 // pred_check
      _
    $region35: #{critic_forward.1} parent=1 // pred_check_branch
      %80 = sbr.rel (0) target = $region37
    $region36: #{critic_forward.1} parent=1 // pred_region
      _
    $region37: #{critic_forward.1} parent=1 // pred_fallthru
      _
    // Predicated region
    $region38: #{critic_forward.1} parent=1 // pred_check
      _
    $region39: #{critic_forward.1} parent=1 // pred_check_branch
      %82 = sbr.rel (0) target = $region41
    $region40: #{critic_forward.1} parent=1 // pred_region
      %83 = dma.done [#allocation4], 128
    $region41: #{critic_forward.1} parent=1 // pred_fallthru
      _
    // Predicated region
    $region42: #{critic_forward.1} parent=1 // pred_check
      _
    $region43: #{critic_forward.1} parent=1 // pred_check_branch
      %85 = sbr.rel (0) target = $region45
    $region44: #{critic_forward.1} parent=1 // pred_region
      %86 = dma.done [#allocation6], 128
    $region45: #{critic_forward.1} parent=1 // pred_fallthru
      _
    // Predicated region
    $region46: #{critic_forward.1} parent=1 // pred_check
      _
    $region47: #{critic_forward.1} parent=1 // pred_check_branch
      %88 = sbr.rel (0) target = $region49
    $region48: #{critic_forward.1} parent=1 // pred_region
      %89 = dma.done [#allocation6], 256
    $region49: #{critic_forward.1} parent=1 // pred_fallthru
      _
    // Predicated region
    $region50: #{critic_forward.1} parent=1 // pred_check
      _
    $region51: #{critic_forward.1} parent=1 // pred_check_branch
      %91 = sbr.rel (0) target = $region53
    $region52: #{critic_forward.1} parent=1 // pred_region
      %92 = dma.done [#allocation9], 128
    $region53: #{critic_forward.1} parent=1 // pred_fallthru
      _
    // Predicated region
    $region54: #{critic_forward.1} parent=1 // pred_check
      _
    $region55: #{critic_forward.1} parent=1 // pred_check_branch
      %94 = sbr.rel (0) target = $region57
    $region56: #{critic_forward.1} parent=1 // pred_region
      %95 = dma.done [#allocation9], 2048
    $region57: #{critic_forward.1} parent=1 // pred_fallthru
      _
    %v96 = vld [vmem:[#allocation3] sm:$0xff]
    %v97 = vld [vmem:[#allocation7] sm:$0xff]
    %v98 = vld [vmem:[#allocation7 + $0x8] sm:$0xff]
    %v99 = vld [vmem:[#allocation5] sm:$0xff]
    %v100 = vld [vmem:[#allocation8] sm:$0xff]
    %vm101 = vcmask 64512
    %v103 = vsel %vm101, %v99, 0
    %105 = vmatprep.subr.mxu0 0.0
    %106 = vmatpush1.msra.mxu0 0.0
    %107 = vmatprep.subr.mxu0 0.0
    %108 = vmatpush1.msra.mxu0 0.0
    %109 = vmatprep.subr.mxu0 0.0
    %110 = vmatpush1.msra.mxu0 0.0
    %111 = vmatprep.subr.mxu0 0.0
    %112 = vmatpush1.msra.mxu0 0.0
    %113 = vmatprep.subr.mxu0 0.0
    %114 = vmatpush1.msra.mxu0 0.0
    %115 = vmatprep.subr.mxu0 0.0
    %116 = vmatpush1.msra.mxu0 0.0
    %117 = vmatprep.subr.mxu0 0.0
    %118 = vmatpush1.msra.mxu0 0.0
    %119 = vmatprep.subr.mxu0 0.0
    %120 = vmatpush1.msra.mxu0 0.0
    %121 = vmatprep.subr.mxu0 0.0
    %122 = vmatpush1.msra.mxu0 0.0
    %123 = vmatprep.subr.mxu0 0.0
    %124 = vmatpush1.msra.mxu0 0.0
    %125 = vmatprep.subr.mxu0 0.0
    %126 = vmatpush1.msra.mxu0 0.0
    %127 = vmatprep.subr.mxu0 0.0
    %128 = vmatpush1.msra.mxu0 0.0
    %129 = vmatprep.subr.mxu0 0.0
    %130 = vmatpush1.msra.mxu0 0.0
    %131 = vmatprep.subr.mxu0 0.0
    %132 = vmatpush1.msra.mxu0 0.0
    %133 = vmatprep.subr.mxu0 0.0
    %134 = vmatpush1.msra.mxu0 0.0
    %135 = vmatprep.subr.mxu0 0.0
    %136 = vmatpush1.msra.mxu0 %v100
    %137 = vmatprep.subr.mxu0 0.0
    %138 = vmatpush2.msra.mxu0 0.0
    %139 = vmatprep.subr.mxu0 0.0
    %140 = vmatpush2.msra.mxu0 0.0
    %141 = vmatprep.subr.mxu0 0.0
    %142 = vmatpush2.msra.mxu0 0.0
    %143 = vmatprep.subr.mxu0 0.0
    %144 = vmatpush2.msra.mxu0 0.0
    %145 = vmatprep.subr.mxu0 0.0
    %146 = vmatpush2.msra.mxu0 0.0
    %147 = vmatprep.subr.mxu0 0.0
    %148 = vmatpush2.msra.mxu0 0.0
    %149 = vmatprep.subr.mxu0 0.0
    %150 = vmatpush2.msra.mxu0 0.0
    %151 = vmatprep.subr.mxu0 0.0
    %152 = vmatpush2.msra.mxu0 0.0
    %153 = vmatprep.subr.mxu0 0.0
    %154 = vmatpush2.msra.mxu0 0.0
    %155 = vmatprep.subr.mxu0 0.0
    %156 = vmatpush2.msra.mxu0 0.0
    %157 = vmatprep.subr.mxu0 0.0
    %158 = vmatpush2.msra.mxu0 0.0
    %159 = vmatprep.subr.mxu0 0.0
    %160 = vmatpush2.msra.mxu0 0.0
    %161 = vmatprep.subr.mxu0 0.0
    %162 = vmatpush2.msra.mxu0 0.0
    %163 = vmatprep.subr.mxu0 0.0
    %164 = vmatpush2.msra.mxu0 0.0
    %165 = vmatprep.subr.mxu0 0.0
    %166 = vmatpush2.msra.mxu0 0.0
    %167 = vmatprep.subr.mxu0 0.0
    %168 = vmatpush2.msra.mxu0 0.0
    %169 = vmatprep.mubr.f32.mxu0 0.0
    %170 = vmatmul.mubr.f32.gmra.mxu0 %v103
    %v171 = vpop.f32.mrf.mxu0
    %v172 = vadd.f32 0.0, %v171
    %v173 = vpop.f32.mrf.mxu0
    %174 = vdwg.mxu0
    %vm175 = vcmask 130048
    %v177 = vsel %vm175, %v96, 0
    %179 = vmatprep.subr.mxu0 0.0
    %180 = vmatpush1.msra.mxu0 0.0
    %181 = vmatprep.subr.mxu0 0.0
    %182 = vmatpush1.msra.mxu0 0.0
    %183 = vmatprep.subr.mxu0 0.0
    %184 = vmatpush1.msra.mxu0 0.0
    %185 = vmatprep.subr.mxu0 0.0
    %186 = vmatpush1.msra.mxu0 0.0
    %187 = vmatprep.subr.mxu0 0.0
    %188 = vmatpush1.msra.mxu0 0.0
    %189 = vmatprep.subr.mxu0 0.0
    %190 = vmatpush1.msra.mxu0 0.0
    %191 = vmatprep.subr.mxu0 0.0
    %192 = vmatpush1.msra.mxu0 0.0
    %193 = vmatprep.subr.mxu0 0.0
    %194 = vmatpush1.msra.mxu0 0.0
    %195 = vmatprep.subr.mxu0 0.0
    %196 = vmatpush1.msra.mxu0 0.0
    %197 = vmatprep.subr.mxu0 0.0
    %198 = vmatpush1.msra.mxu0 0.0
    %199 = vmatprep.subr.mxu0 0.0
    %200 = vmatpush1.msra.mxu0 0.0
    %201 = vmatprep.subr.mxu0 0.0
    %202 = vmatpush1.msra.mxu0 0.0
    %203 = vmatprep.subr.mxu0 0.0
    %204 = vmatpush1.msra.mxu0 0.0
    %205 = vmatprep.subr.mxu0 0.0
    %206 = vmatpush1.msra.mxu0 0.0
    %207 = vmatprep.subr.mxu0 0.0
    %208 = vmatpush1.msra.mxu0 %v98
    %209 = vmatprep.subr.mxu0 0.0
    %210 = vmatpush1.msra.mxu0 %v97
    %211 = vmatprep.subr.mxu0 0.0
    %212 = vmatpush2.msra.mxu0 0.0
    %213 = vmatprep.subr.mxu0 0.0
    %214 = vmatpush2.msra.mxu0 0.0
    %215 = vmatprep.subr.mxu0 0.0
    %216 = vmatpush2.msra.mxu0 0.0
    %217 = vmatprep.subr.mxu0 0.0
    %218 = vmatpush2.msra.mxu0 0.0
    %219 = vmatprep.subr.mxu0 0.0
    %220 = vmatpush2.msra.mxu0 0.0
    %221 = vmatprep.subr.mxu0 0.0
    %222 = vmatpush2.msra.mxu0 0.0
    %223 = vmatprep.subr.mxu0 0.0
    %224 = vmatpush2.msra.mxu0 0.0
    %225 = vmatprep.subr.mxu0 0.0
    %226 = vmatpush2.msra.mxu0 0.0
    %227 = vmatprep.subr.mxu0 0.0
    %228 = vmatpush2.msra.mxu0 0.0
    %229 = vmatprep.subr.mxu0 0.0
    %230 = vmatpush2.msra.mxu0 0.0
    %231 = vmatprep.subr.mxu0 0.0
    %232 = vmatpush2.msra.mxu0 0.0
    %233 = vmatprep.subr.mxu0 0.0
    %234 = vmatpush2.msra.mxu0 0.0
    %235 = vmatprep.subr.mxu0 0.0
    %236 = vmatpush2.msra.mxu0 0.0
    %237 = vmatprep.subr.mxu0 0.0
    %238 = vmatpush2.msra.mxu0 0.0
    %239 = vmatprep.subr.mxu0 0.0
    %240 = vmatpush2.msra.mxu0 0.0
    %241 = vmatprep.subr.mxu0 0.0
    %242 = vmatpush2.msra.mxu0 0.0
    %243 = vmatprep.mubr.f32.mxu0 0.0
    %244 = vmatmul.mubr.f32.gmra.mxu0 %v177
    %v245 = vpop.f32.mrf.mxu0
    %v246 = vadd.f32 %v172, %v245
    %v247 = vpop.f32.mrf.mxu0
    %248 = vdwg.mxu0
    %v249 = vld [vmem:[%s4] sm:$0x1]
    %v251 = vlaneseq
    %v252 = vshrl.u32 %v251, 7
    %v253 = vsub.s32 0, %v252
    %v254 = vrot.slane %v249, %v253
    %v256 = vadd.f32 %v246, %v254
    %v257 = vmax.f32 %v256, 0.0
    %v258 = vld [vmem:[#allocation10] sm:$0xff]
    %v259 = vld [vmem:[#allocation10 + $0x8] sm:$0xff]
    %v260 = vld [vmem:[#allocation10 + $0x10] sm:$0xff]
    %v261 = vld [vmem:[#allocation10 + $0x18] sm:$0xff]
    %v262 = vld [vmem:[#allocation10 + $0x20] sm:$0xff]
    %v263 = vld [vmem:[#allocation10 + $0x28] sm:$0xff]
    %v264 = vld [vmem:[#allocation10 + $0x30] sm:$0xff]
    %v265 = vld [vmem:[#allocation10 + $0x38] sm:$0xff]
    %v266 = vld [vmem:[#allocation10 + $0x40] sm:$0xff]
    %v267 = vld [vmem:[#allocation10 + $0x48] sm:$0xff]
    %v268 = vld [vmem:[#allocation10 + $0x50] sm:$0xff]
    %v269 = vld [vmem:[#allocation10 + $0x58] sm:$0xff]
    %v270 = vld [vmem:[#allocation10 + $0x60] sm:$0xff]
    %v271 = vld [vmem:[#allocation10 + $0x68] sm:$0xff]
    %v272 = vld [vmem:[#allocation10 + $0x70] sm:$0xff]
    %v273 = vld [vmem:[#allocation10 + $0x78] sm:$0xff]
    %v274 = vld [vmem:[%s6] sm:$0x1]
    %v276 = vlaneseq
    %v277 = vshrl.u32 %v276, 7
    %v278 = vsub.s32 0, %v277
    %v279 = vrot.slane %v274, %v278
    %281 = vmatprep.subr.mxu0 0.0
    %282 = vmatpush1.msra.mxu0 %v273
    %283 = vmatprep.subr.mxu0 0.0
    %284 = vmatpush1.msra.mxu0 %v272
    %285 = vmatprep.subr.mxu0 0.0
    %286 = vmatpush1.msra.mxu0 %v271
    %287 = vmatprep.subr.mxu0 0.0
    %288 = vmatpush1.msra.mxu0 %v270
    %289 = vmatprep.subr.mxu0 0.0
    %290 = vmatpush1.msra.mxu0 %v269
    %291 = vmatprep.subr.mxu0 0.0
    %292 = vmatpush1.msra.mxu0 %v268
    %293 = vmatprep.subr.mxu0 0.0
    %294 = vmatpush1.msra.mxu0 %v267
    %295 = vmatprep.subr.mxu0 0.0
    %296 = vmatpush1.msra.mxu0 %v266
    %297 = vmatprep.subr.mxu0 0.0
    %298 = vmatpush1.msra.mxu0 %v265
    %299 = vmatprep.subr.mxu0 0.0
    %300 = vmatpush1.msra.mxu0 %v264
    %301 = vmatprep.subr.mxu0 0.0
    %302 = vmatpush1.msra.mxu0 %v263
    %303 = vmatprep.subr.mxu0 0.0
    %304 = vmatpush1.msra.mxu0 %v262
    %305 = vmatprep.subr.mxu0 0.0
    %306 = vmatpush1.msra.mxu0 %v261
    %307 = vmatprep.subr.mxu0 0.0
    %308 = vmatpush1.msra.mxu0 %v260
    %309 = vmatprep.subr.mxu0 0.0
    %310 = vmatpush1.msra.mxu0 %v259
    %311 = vmatprep.subr.mxu0 0.0
    %312 = vmatpush1.msra.mxu0 %v258
    %313 = vmatprep.subr.mxu0 0.0
    %314 = vmatpush2.msra.mxu0 0.0
    %315 = vmatprep.subr.mxu0 0.0
    %316 = vmatpush2.msra.mxu0 0.0
    %317 = vmatprep.subr.mxu0 0.0
    %318 = vmatpush2.msra.mxu0 0.0
    %319 = vmatprep.subr.mxu0 0.0
    %320 = vmatpush2.msra.mxu0 0.0
    %321 = vmatprep.subr.mxu0 0.0
    %322 = vmatpush2.msra.mxu0 0.0
    %323 = vmatprep.subr.mxu0 0.0
    %324 = vmatpush2.msra.mxu0 0.0
    %325 = vmatprep.subr.mxu0 0.0
    %326 = vmatpush2.msra.mxu0 0.0
    %327 = vmatprep.subr.mxu0 0.0
    %328 = vmatpush2.msra.mxu0 0.0
    %329 = vmatprep.subr.mxu0 0.0
    %330 = vmatpush2.msra.mxu0 0.0
    %331 = vmatprep.subr.mxu0 0.0
    %332 = vmatpush2.msra.mxu0 0.0
    %333 = vmatprep.subr.mxu0 0.0
    %334 = vmatpush2.msra.mxu0 0.0
    %335 = vmatprep.subr.mxu0 0.0
    %336 = vmatpush2.msra.mxu0 0.0
    %337 = vmatprep.subr.mxu0 0.0
    %338 = vmatpush2.msra.mxu0 0.0
    %339 = vmatprep.subr.mxu0 0.0
    %340 = vmatpush2.msra.mxu0 0.0
    %341 = vmatprep.subr.mxu0 0.0
    %342 = vmatpush2.msra.mxu0 0.0
    %343 = vmatprep.subr.mxu0 0.0
    %344 = vmatpush2.msra.mxu0 0.0
    %345 = vmatprep.mubr.f32.mxu0 0.0
    %346 = vmatmul.mubr.f32.gmra.mxu0 %v257
    %v347 = vpop.f32.mrf.mxu0
    %v348 = vadd.f32 %v279, %v347
    %v349 = vpop.f32.mrf.mxu0
    %350 = vdwg.mxu0
    %v351 = vmax.f32 %v348, 0.0
    %v352 = vld [vmem:[%s7] sm:$0x1]
    %v354 = vlaneseq
    %v355 = vshrl.u32 %v354, 7
    %v356 = vsub.s32 0, %v355
    %v357 = vrot.slane %v352, %v356
    %v359 = vmul.f32 %v351, %v357
    %360 = vadd.xlane.f32.xlu0 %v359
    %v361 = vpop.xlane.xlu0 %360
    %v362 = vld [vmem:[#allocation2] sm:$0x1]
    %v364 = vlaneseq
    %v365 = vshrl.u32 %v364, 7
    %v366 = vsub.s32 0, %v365
    %v367 = vrot.slane %v362, %v366
    %v369 = vadd.f32 %v361, %v367
    %vm370 = vcmask 7168
    %371 = vst.msk [vmem:[%s9] sm:$0xff] %vm370, %v369
    // Predicated region
    $region58: #{critic_forward.1} parent=1 // pred_check
      _
    $region59: #{critic_forward.1} parent=1 // pred_check_branch
      %373 = sbr.rel (0) target = $region61
    $region60: #{critic_forward.1} parent=1 // pred_region
      _
    $region61: #{critic_forward.1} parent=1 // pred_fallthru
      _
    // Predicated region
    $region62: #{critic_forward.1} parent=1 // pred_check
      _
    $region63: #{critic_forward.1} parent=1 // pred_check_branch
      %375 = sbr.rel (0) target = $region65
    $region64: #{critic_forward.1} parent=1 // pred_region
      _
    $region65: #{critic_forward.1} parent=1 // pred_fallthru
      _
    %376 = vsyncpa [#allocation4], 1
    %377 = vsyncpa [#allocation6], 1
    %378 = vsyncpa [#allocation9], 1

</llo_original>
